<compile_context>
chip_gen: v7x
topology: tpu7x:2x2x1
jax: 0.10.0
libtpu: 0.0.40
codegen_flags: <defaults>
</compile_context>

<pallas_src>
import functools

import jax
import jax.numpy as jnp
from jax.experimental import pallas as pl
from jax.experimental.pallas import tpu as pltpu


def _interp_matrix(out_size: int, in_size: int) -> jnp.ndarray:
    """Bilinear interpolation matrix, PyTorch align_corners=True semantics."""
    y = jnp.arange(out_size, dtype=jnp.float32)
    if out_size > 1:
        src = y * (in_size - 1) / (out_size - 1)
    else:
        src = jnp.zeros_like(y)
    i0 = jnp.clip(jnp.floor(src).astype(jnp.int32), 0, in_size - 1)
    i1 = jnp.clip(i0 + 1, 0, in_size - 1)
    w1 = src - i0.astype(jnp.float32)
    w0 = 1.0 - w1
    rows = jnp.arange(out_size)
    m = jnp.zeros((out_size, in_size), dtype=jnp.float32)
    m = m.at[rows, i0].add(w0).at[rows, i1].add(w1)
    return m


def _num_tensorcores() -> int:
    """Best-effort TensorCore count per chip (v7x / megacore -> 2, else 1)."""
    try:
        kind = jax.devices()[0].device_kind.lower()
    except Exception:
        return 1
    if ("v7" in kind) or ("v4" in kind) or ("v5p" in kind):
        return 2
    return 1  # v5e / v6e: single TensorCore -> minimize grid steps


def _pick_block_n(n: int, num_tc: int, max_nb: int = 8) -> int:
    """Batch elements per grid step.

    Single-TC chips: largest divisor of N (<= max_nb) -> grid=(1,) when possible.
    Dual-TC chips: keep >= 2 steps per core when N allows, so the batch axis can
    be sharded across cores via dimension_semantics=("parallel",).
    (max_nb also bounds per-step VMEM; at these toy shapes it is never binding.)
    """
    desired_steps = 1 if num_tc <= 1 else 2 * num_tc
    divisors = [d for d in range(1, min(n, max_nb) + 1) if n % d == 0]
    for d in sorted(divisors, reverse=True):
        if n // d >= desired_steps:
            return d
    return 1


def _miou_kernel(x_ref, tgt_ref, a_ref, bt_ref, cls_ref, out_ref,
                 *, num_classes: int, out_h: int, out_w: int,
                 in_h: int, block_n: int):
    """Per-grid-step kernel handling `block_n` batch elements.

    x_ref   : (nb*C*h_in, w_in)  logits, rows ordered (b, c, h_in) (pure NCHW reshape)
    tgt_ref : (nb*H, W)          int32 labels, rows ordered (b, h)
    a_ref   : (H, h_in)          row (height) interpolation matrix
    bt_ref  : (w_in, W)          column (width) interpolation matrix, transposed
    cls_ref : (1, C*W)           int32 class id of each output lane (c*W + w -> c)
    out_ref : (nb, 2, C*W)       [:,0,:] intersection row-sums, [:,1,:] union row-sums
    """
    C, H, W, h_in, nb = num_classes, out_h, out_w, in_h, block_n
    CW = C * W

    # ---- width resize: ONE dense MXU dot fused over batch sub-block and classes ----
    x = x_ref[...].astype(jnp.float32)                              # (nb*C*h_in, w_in)
    y = jnp.dot(x, bt_ref[...],
                preferred_element_type=jnp.float32)                 # (nb*C*h_in, W)

    # ---- move classes to lanes, then height-resize per batch element ------------
    # (small static-slice relayout replaces the old kron(I_C, B^T) zero padding)
    a = a_ref[...]                                                  # (H, h_in)
    z_blocks = []
    for b in range(nb):
        pieces = [y[(b * C + c) * h_in:(b * C + c + 1) * h_in, :]   # (h_in, W)
                  for c in range(C)]
        yl_b = jnp.concatenate(pieces, axis=1)                      # (h_in, C*W)
        z_blocks.append(jnp.dot(a, yl_b,
                                preferred_element_type=jnp.float32))  # (H, C*W)
    z = jnp.concatenate(z_blocks, axis=0) if nb > 1 else z_blocks[0]  # (nb*H, C*W)

    # ---- softmax over class groups (lanes c*W + w), vectorized over (b, h) ------
    # cross-class max: tree-folded rolls (duplicate coverage is harmless for max)
    m = z
    shift = W
    while shift < CW:
        m = jnp.maximum(m, pltpu.roll(m, shift=shift, axis=1))
        shift *= 2
    e = jnp.exp(z - m)
    if (C & (C - 1)) == 0:
        # power-of-two class count: exact tree-folded sum (log2(C) rolls)
        s = e
        shift = W
        while shift < CW:
            s = s + pltpu.roll(s, shift=shift, axis=1)
            shift *= 2
    else:
        # non-power-of-two: linear fold (tree fold would double-count groups)
        s = e
        for k in range(1, C):
            s = s + pltpu.roll(e, shift=k * W, axis=1)
    # EUP approximate reciprocal + one Newton-Raphson step (rel. err ~1e-8)
    r = pl.reciprocal(s, approx=True)
    r = r * (2.0 - s * r)
    p = e * r                                                       # (nb*H, C*W)

    # ---- one-hot target in the same lane-dense layout (built once per step) -----
    tgt = tgt_ref[...]                                              # (nb*H, W) int32
    tgt_tiled = jnp.concatenate([tgt] * C, axis=1)                  # (nb*H, C*W)
    # ignore_index never equals a valid class id (asserted in the wrapper),
    # so no extra valid-mask is needed.
    oh = (tgt_tiled == cls_ref[...]).astype(jnp.float32)            # (nb*H, C*W)

    # ---- per-(batch, class-column) sums; union = sum(p) + count - inter ----------
    def bsum(v):                                                    # -> (nb, C*W)
        return jnp.sum(v.reshape(nb, H, CW), axis=1)

    inter = bsum(p * oh)
    union = bsum(p) + bsum(oh) - inter
    out_ref[:, 0, :] = inter
    out_ref[:, 1, :] = union


def miou_loss(logits, target, num_classes: int, ignore_index: int = 255,
              *, matmul_dtype=None):
    """Pallas implementation of mIoULoss.forward(inputs, target)."""
    logits = logits.astype(jnp.float32)
    target = target.astype(jnp.int32)
    N, C, h_in, w_in = logits.shape
    _, H, W = target.shape
    assert C == num_classes
    # The one-hot trick relies on ignore_index never matching a valid class id.
    assert ignore_index < 0 or ignore_index >= num_classes

    # Pure reshapes only (no wrapper-side transpose/relayout in HBM).
    x2 = logits.reshape(N * C * h_in, w_in)                         # rows (b, c, h_in)
    if matmul_dtype is not None:
        # Optional bandwidth-only narrowing of the logits; the kernel upcasts to
        # f32 before the MXU dots, and the interpolation matrices stay f32.
        x2 = x2.astype(matmul_dtype)
    t2 = target.reshape(N * H, W)                                   # rows (b, h)

    A = _interp_matrix(H, h_in)                                     # (H, h_in)
    BT = _interp_matrix(W, w_in).T                                  # (w_in, W), dense
    cls_row = jnp.repeat(jnp.arange(C, dtype=jnp.int32), W).reshape(1, C * W)

    num_tc = _num_tensorcores()
    nb = _pick_block_n(N, num_tc)
    grid = (N // nb,)

    kernel = functools.partial(_miou_kernel, num_classes=C, out_h=H, out_w=W,
                               in_h=h_in, block_n=nb)

    out = pl.pallas_call(
        kernel,
        out_shape=jax.ShapeDtypeStruct((N, 2, C * W), jnp.float32),
        grid_spec=pltpu.PrefetchScalarGridSpec(
            num_scalar_prefetch=0,
            grid=grid,
            in_specs=[
                pl.BlockSpec((nb * C * h_in, w_in), lambda g: (g, 0)),
                pl.BlockSpec((nb * H, W), lambda g: (g, 0)),
                pl.BlockSpec((H, h_in), lambda g: (0, 0)),
                pl.BlockSpec((w_in, W), lambda g: (0, 0)),
                pl.BlockSpec((1, C * W), lambda g: (0, 0)),
            ],
            out_specs=pl.BlockSpec((nb, 2, C * W), lambda g: (g, 0, 0)),
        ),
        compiler_params=pltpu.CompilerParams(
            dimension_semantics=("parallel",)),
    )(x2, t2, A, BT, cls_row)

    # Tiny final reduction (N*2*C*W -> N*C) kept in plain JAX.
    sums = out.reshape(N, 2, C, W).sum(axis=-1)
    intersection = sums[:, 0, :]                                    # (N, C)
    union = sums[:, 1, :]                                           # (N, C)

    valid_classes = (union > 0).astype(jnp.float32)
    iou = intersection / (union + 1e-10)
    miou = jnp.sum(iou * valid_classes) / jnp.sum(valid_classes)
    return 1.0 - miou


def miou_loss_ref(logits, target, num_classes: int, ignore_index: int = 255):
    """Pure-JAX reference (same math as the PyTorch module's loss head)."""
    logits = logits.astype(jnp.float32)
    target = target.astype(jnp.int32)
    N, C, h_in, w_in = logits.shape
    _, H, W = target.shape
    A = _interp_matrix(H, h_in)
    B = _interp_matrix(W, w_in)
    resized = jnp.einsum('hi,nciw,jw->nchj', A, logits, B)   # bilinear, align_corners
    preds = jax.nn.softmax(resized, axis=1)
    valid = (target != ignore_index)
    tgt_v = jnp.where(valid, target, 0)
    onehot = jax.nn.one_hot(tgt_v, num_classes, axis=1, dtype=jnp.float32)
    onehot = onehot * valid[:, None, :, :].astype(jnp.float32)
    inter = jnp.sum(preds * onehot, axis=(2, 3))
    union = jnp.sum(preds + onehot - preds * onehot, axis=(2, 3))
    vc = (union > 0).astype(jnp.float32)
    iou = inter / (union + 1e-10)
    return 1.0 - jnp.sum(iou * vc) / jnp.sum(vc)


if __name__ == "__main__":
    NUM_CLASSES = 4
    IGNORE = 255
    N, C, HIN, WIN = 2, NUM_CLASSES, 16, 16   # logits (NCHW)
    H, W = 32, 32                             # target spatial size (upsampled)

    key = jax.random.PRNGKey(0)
    k1, k2, k3 = jax.random.split(key, 3)
    logits = jax.random.normal(k1, (N, C, HIN, WIN), dtype=jnp.float32)
    target = jax.random.randint(k2, (N, H, W), 0, NUM_CLASSES, dtype=jnp.int32)
    # sprinkle some ignore_index pixels
    ignore_mask = jax.random.uniform(k3, (N, H, W)) < 0.1
    target = jnp.where(ignore_mask, IGNORE, target)

    loss = miou_loss(logits, target, NUM_CLASSES, IGNORE)
    loss = jax.block_until_ready(loss)

    loss_ref = jax.block_until_ready(miou_loss_ref(logits, target, NUM_CLASSES, IGNORE))
    assert jnp.allclose(loss, loss_ref, atol=1e-5, rtol=1e-4), (loss, loss_ref)

    print("KERNEL_OK")
</pallas_src>

<mosaic_0001>
module attributes {stable_mosaic.version = 11 : i64} {
  func.func @_miou_kernel(%arg0: i32, %arg1: memref<128x16xf32, #tpu.memory_space<vmem>>, %arg2: memref<64x32xi32, #tpu.memory_space<vmem>>, %arg3: memref<32x16xf32, #tpu.memory_space<vmem>>, %arg4: memref<16x32xf32, #tpu.memory_space<vmem>>, %arg5: memref<1x128xi32, #tpu.memory_space<vmem>>, %arg6: memref<2x2x128xf32, #tpu.memory_space<vmem>>) attributes {dimension_semantics = [#tpu.dimension_semantics<parallel>], iteration_bounds = array<i64: 1>, scalar_prefetch = 0 : i64, scratch_operands = 0 : i64, tpu.core_type = #tpu.core_type<tc>, window_params = [{transform_indices = @transform_0, window_bounds = array<i64: 128, 16>}, {transform_indices = @transform_1, window_bounds = array<i64: 64, 32>}, {pipeline_mode = #tpu.pipeline_mode<synchronous>, transform_indices = @transform_2, window_bounds = array<i64: 32, 16>}, {pipeline_mode = #tpu.pipeline_mode<synchronous>, transform_indices = @transform_3, window_bounds = array<i64: 16, 32>}, {pipeline_mode = #tpu.pipeline_mode<synchronous>, transform_indices = @transform_4, window_bounds = array<i64: 1, 128>}, {transform_indices = @transform_5, window_bounds = array<i64: 2, 2, 128>}]} {
    %c0 = arith.constant 0 : index
    %c0_0 = arith.constant 0 : index
    %0 = vector.load %arg1[%c0, %c0_0] : memref<128x16xf32, #tpu.memory_space<vmem>>, vector<128x16xf32>
    %c0_1 = arith.constant 0 : index
    %c0_2 = arith.constant 0 : index
    %1 = vector.load %arg4[%c0_1, %c0_2] : memref<16x32xf32, #tpu.memory_space<vmem>>, vector<16x32xf32>
    %cst = arith.constant dense<0.000000e+00> : vector<128x32xf32>
    %2 = tpu.matmul %0, %1, %cst {dimension_numbers = #tpu.dot_dimension_numbers<[1], [0], [0], [1], [0, 0, 1, 1], [], []>} : vector<128x16xf32>, vector<16x32xf32>, vector<128x32xf32> -> vector<128x32xf32>
    %c0_3 = arith.constant 0 : index
    %c0_4 = arith.constant 0 : index
    %3 = vector.load %arg3[%c0_3, %c0_4] : memref<32x16xf32, #tpu.memory_space<vmem>>, vector<32x16xf32>
    %4 = vector.extract_strided_slice %2 {offsets = [0, 0], sizes = [16, 32], strides = [1, 1]} : vector<128x32xf32> to vector<16x32xf32>
    %5 = vector.extract_strided_slice %2 {offsets = [16, 0], sizes = [16, 32], strides = [1, 1]} : vector<128x32xf32> to vector<16x32xf32>
    %6 = vector.extract_strided_slice %2 {offsets = [32, 0], sizes = [16, 32], strides = [1, 1]} : vector<128x32xf32> to vector<16x32xf32>
    %7 = vector.extract_strided_slice %2 {offsets = [48, 0], sizes = [16, 32], strides = [1, 1]} : vector<128x32xf32> to vector<16x32xf32>
    %8 = tpu.concatenate %4, %5, %6, %7 in 1 : vector<16x32xf32>, vector<16x32xf32>, vector<16x32xf32>, vector<16x32xf32> -> vector<16x128xf32>
    %cst_5 = arith.constant dense<0.000000e+00> : vector<32x128xf32>
    %9 = tpu.matmul %3, %8, %cst_5 {dimension_numbers = #tpu.dot_dimension_numbers<[1], [0], [0], [1], [0, 0, 1, 1], [], []>} : vector<32x16xf32>, vector<16x128xf32>, vector<32x128xf32> -> vector<32x128xf32>
    %10 = vector.extract_strided_slice %2 {offsets = [64, 0], sizes = [16, 32], strides = [1, 1]} : vector<128x32xf32> to vector<16x32xf32>
    %11 = vector.extract_strided_slice %2 {offsets = [80, 0], sizes = [16, 32], strides = [1, 1]} : vector<128x32xf32> to vector<16x32xf32>
    %12 = vector.extract_strided_slice %2 {offsets = [96, 0], sizes = [16, 32], strides = [1, 1]} : vector<128x32xf32> to vector<16x32xf32>
    %13 = vector.extract_strided_slice %2 {offsets = [112, 0], sizes = [16, 32], strides = [1, 1]} : vector<128x32xf32> to vector<16x32xf32>
    %14 = tpu.concatenate %10, %11, %12, %13 in 1 : vector<16x32xf32>, vector<16x32xf32>, vector<16x32xf32>, vector<16x32xf32> -> vector<16x128xf32>
    %cst_6 = arith.constant dense<0.000000e+00> : vector<32x128xf32>
    %15 = tpu.matmul %3, %14, %cst_6 {dimension_numbers = #tpu.dot_dimension_numbers<[1], [0], [0], [1], [0, 0, 1, 1], [], []>} : vector<32x16xf32>, vector<16x128xf32>, vector<32x128xf32> -> vector<32x128xf32>
    %16 = tpu.concatenate %9, %15 in 0 : vector<32x128xf32>, vector<32x128xf32> -> vector<64x128xf32>
    %c32_i32 = arith.constant 32 : i32
    %17 = tpu.dynamic_rotate %16 by %c32_i32 dim 1 : vector<64x128xf32>, i32 -> vector<64x128xf32>
    %18 = arith.maximumf %16, %17 : vector<64x128xf32>
    %c64_i32 = arith.constant 64 : i32
    %19 = tpu.dynamic_rotate %18 by %c64_i32 dim 1 : vector<64x128xf32>, i32 -> vector<64x128xf32>
    %20 = arith.maximumf %18, %19 : vector<64x128xf32>
    %21 = arith.subf %16, %20 : vector<64x128xf32>
    %22 = math.exp %21 : vector<64x128xf32>
    %c32_i32_7 = arith.constant 32 : i32
    %23 = tpu.dynamic_rotate %22 by %c32_i32_7 dim 1 : vector<64x128xf32>, i32 -> vector<64x128xf32>
    %24 = arith.addf %22, %23 : vector<64x128xf32>
    %c64_i32_8 = arith.constant 64 : i32
    %25 = tpu.dynamic_rotate %24 by %c64_i32_8 dim 1 : vector<64x128xf32>, i32 -> vector<64x128xf32>
    %26 = arith.addf %24, %25 : vector<64x128xf32>
    %27 = tpu.reciprocal %26 {approx = true} : vector<64x128xf32> -> vector<64x128xf32>
    %28 = arith.mulf %26, %27 : vector<64x128xf32>
    %cst_9 = arith.constant 2.000000e+00 : f32
    %29 = vector.broadcast %cst_9 : f32 to vector<64x128xf32>
    %30 = arith.subf %29, %28 : vector<64x128xf32>
    %31 = arith.mulf %27, %30 : vector<64x128xf32>
    %32 = arith.mulf %22, %31 : vector<64x128xf32>
    %c0_10 = arith.constant 0 : index
    %c0_11 = arith.constant 0 : index
    %33 = vector.load %arg2[%c0_10, %c0_11] : memref<64x32xi32, #tpu.memory_space<vmem>>, vector<64x32xi32>
    %34 = tpu.concatenate %33, %33, %33, %33 in 1 : vector<64x32xi32>, vector<64x32xi32>, vector<64x32xi32>, vector<64x32xi32> -> vector<64x128xi32>
    %c0_12 = arith.constant 0 : index
    %c0_13 = arith.constant 0 : index
    %35 = vector.load %arg5[%c0_12, %c0_13] : memref<1x128xi32, #tpu.memory_space<vmem>>, vector<1x128xi32>
    %36 = vector.broadcast %35 : vector<1x128xi32> to vector<64x128xi32>
    %37 = arith.cmpi eq, %34, %36 : vector<64x128xi32>
    %38 = arith.extui %37 : vector<64x128xi1> to vector<64x128xi32>
    %39 = arith.sitofp %38 : vector<64x128xi32> to vector<64x128xf32>
    %40 = arith.mulf %32, %39 : vector<64x128xf32>
    %41 = vector.shape_cast %40 : vector<64x128xf32> to vector<2x32x128xf32>
    %cst_14 = arith.constant dense<0.000000e+00> : vector<2x128xf32>
    %42 = vector.multi_reduction <add>, %41, %cst_14 [1] : vector<2x32x128xf32> to vector<2x128xf32>
    %43 = vector.shape_cast %32 : vector<64x128xf32> to vector<2x32x128xf32>
    %cst_15 = arith.constant dense<0.000000e+00> : vector<2x128xf32>
    %44 = vector.multi_reduction <add>, %43, %cst_15 [1] : vector<2x32x128xf32> to vector<2x128xf32>
    %45 = vector.shape_cast %39 : vector<64x128xf32> to vector<2x32x128xf32>
    %cst_16 = arith.constant dense<0.000000e+00> : vector<2x128xf32>
    %46 = vector.multi_reduction <add>, %45, %cst_16 [1] : vector<2x32x128xf32> to vector<2x128xf32>
    %47 = arith.addf %44, %46 : vector<2x128xf32>
    %48 = arith.subf %47, %42 : vector<2x128xf32>
    %c0_17 = arith.constant 0 : index
    %c0_18 = arith.constant 0 : index
    %c0_19 = arith.constant 0 : index
    %49 = vector.load %arg6[%c0_17, %c0_18, %c0_19] : memref<2x2x128xf32, #tpu.memory_space<vmem>>, vector<2x1x128xf32>
    %50 = vector.shape_cast %49 : vector<2x1x128xf32> to vector<2x128xf32>
    %51 = vector.shape_cast %42 : vector<2x128xf32> to vector<2x1x128xf32>
    tpu.vector_store %arg6[%c0_17, %c0_18, %c0_19], %51 {strides = array<i32>} : memref<2x2x128xf32, #tpu.memory_space<vmem>>, vector<2x1x128xf32>,
    %c0_20 = arith.constant 0 : index
    %c1 = arith.constant 1 : index
    %c0_21 = arith.constant 0 : index
    %52 = vector.load %arg6[%c0_20, %c1, %c0_21] : memref<2x2x128xf32, #tpu.memory_space<vmem>>, vector<2x1x128xf32>
    %53 = vector.shape_cast %52 : vector<2x1x128xf32> to vector<2x128xf32>
    %54 = vector.shape_cast %48 : vector<2x128xf32> to vector<2x1x128xf32>
    tpu.vector_store %arg6[%c0_20, %c1, %c0_21], %54 {strides = array<i32>} : memref<2x2x128xf32, #tpu.memory_space<vmem>>, vector<2x1x128xf32>,
    return
  }
  func.func @transform_0(%arg0: i32) -> (i32, i32) {
    %c0_i32 = arith.constant 0 : i32
    %c0_i32_0 = arith.constant 0 : i32
    return %arg0, %c0_i32 : i32, i32
  }
  func.func @transform_1(%arg0: i32) -> (i32, i32) {
    %c0_i32 = arith.constant 0 : i32
    %c0_i32_0 = arith.constant 0 : i32
    return %arg0, %c0_i32 : i32, i32
  }
  func.func @transform_2(%arg0: i32) -> (i32, i32) {
    %c0_i32 = arith.constant 0 : i32
    %c0_i32_0 = arith.constant 0 : i32
    %c0_i32_1 = arith.constant 0 : i32
    return %c0_i32, %c0_i32_0 : i32, i32
  }
  func.func @transform_3(%arg0: i32) -> (i32, i32) {
    %c0_i32 = arith.constant 0 : i32
    %c0_i32_0 = arith.constant 0 : i32
    %c0_i32_1 = arith.constant 0 : i32
    return %c0_i32, %c0_i32_0 : i32, i32
  }
  func.func @transform_4(%arg0: i32) -> (i32, i32) {
    %c0_i32 = arith.constant 0 : i32
    %c0_i32_0 = arith.constant 0 : i32
    %c0_i32_1 = arith.constant 0 : i32
    return %c0_i32, %c0_i32_0 : i32, i32
  }
  func.func @transform_5(%arg0: i32) -> (i32, i32, i32) {
    %c0_i32 = arith.constant 0 : i32
    %c0_i32_0 = arith.constant 0 : i32
    %c0_i32_1 = arith.constant 0 : i32
    return %arg0, %c0_i32, %c0_i32_0 : i32, i32, i32
  }
}

</mosaic_0001>

<llo_original>
// kernel: tpu_custom_call.1
$region0: #{tpu_custom_call.1}
  #allocation0 [shape = 'u32[]', space=smem, size = 0x4, offset = 0x4, fixed_abs, tag = 'smem constant byte address 0x4 - core index']
  #allocation1 [shape = 'u32[144,128]{1,0:T(1,128)}', space=vmem, size = 0x12000, scoped, tag = 'internal scratch']
  %s0 = inlined_call_operand.vmem [shape: f32[128,16], index: 0, kind: input, shape index: {}]
  %s1 = inlined_call_operand.vmem [shape: s32[64,32], index: 1, kind: input, shape index: {}]
  %s2 = inlined_call_operand.vmem [shape: f32[32,16], index: 2, kind: input, shape index: {}]
  %s3 = inlined_call_operand.vmem [shape: f32[16,32], index: 3, kind: input, shape index: {}]
  %s4 = inlined_call_operand.vmem [shape: s32[1,128], index: 4, kind: input, shape index: {}]
  %s5 = inlined_call_operand.hbm [shape: f32[2,2,128], index: 5, kind: output, shape index: {}]
  %s6 = sld [smem:[#allocation0]]
  $region30: #{tpu_custom_call.1} parent=0
    _
  %s8 = ssub.s32 1, %s6
  %s9 = scalar_select 0, %s8, %s6
  $region1: #{tpu_custom_call.1} parent=0
    #allocation2 [shape = 'u8[2048]{0}', space=vmem, size = 0x800, scoped, tag = 'output window, operand 0, single buffered']
    #allocation3 [shape = 's32[1]{0}', space=sflag, size = 0x4, scoped, tag = 'scoped memory for tpu_custom_call.1']
    %10 = vsyncpa [#allocation3], 0
    // Predicated region
    $region2: #{tpu_custom_call.1} parent=1 // pred_check
      _
    $region3: #{tpu_custom_call.1} parent=1 // pred_check_branch
      %12 = sbr.rel (0) target = $region5
    $region4: #{tpu_custom_call.1} parent=1 // pred_region
      _
    $region5: #{tpu_custom_call.1} parent=1 // pred_fallthru
      _
    // Predicated region
    $region6: #{tpu_custom_call.1} parent=1 // pred_check
      _
    $region7: #{tpu_custom_call.1} parent=1 // pred_check_branch
      %14 = sbr.rel (0) target = $region9
    $region8: #{tpu_custom_call.1} parent=1 // pred_region
      _
    $region9: #{tpu_custom_call.1} parent=1 // pred_fallthru
      _
    // Predicated region
    $region10: #{tpu_custom_call.1} parent=1 // pred_check
      _
    $region11: #{tpu_custom_call.1} parent=1 // pred_check_branch
      %16 = sbr.rel (0) target = $region13
    $region12: #{tpu_custom_call.1} parent=1 // pred_region
      _
    $region13: #{tpu_custom_call.1} parent=1 // pred_fallthru
      _
    // Predicated region
    $region14: #{tpu_custom_call.1} parent=1 // pred_check
      _
    $region15: #{tpu_custom_call.1} parent=1 // pred_check_branch
      %18 = sbr.rel (0) target = $region17
    $region16: #{tpu_custom_call.1} parent=1 // pred_region
      _
    $region17: #{tpu_custom_call.1} parent=1 // pred_fallthru
      _
    // Predicated region
    $region18: #{tpu_custom_call.1} parent=1 // pred_check
      _
    $region19: #{tpu_custom_call.1} parent=1 // pred_check_branch
      %20 = sbr.rel (0) target = $region21
    $region20: #{tpu_custom_call.1} parent=1 // pred_region
      _
    $region21: #{tpu_custom_call.1} parent=1 // pred_fallthru
      _
    %v21 = vld [vmem:[%s0] sm:$0xff]
    %v22 = vld [vmem:[%s0 + $0x8] sm:$0xff]
    %v23 = vld [vmem:[%s0 + $0x10] sm:$0xff]
    %v24 = vld [vmem:[%s0 + $0x18] sm:$0xff]
    %v25 = vld [vmem:[%s0 + $0x20] sm:$0xff]
    %v26 = vld [vmem:[%s0 + $0x28] sm:$0xff]
    %v27 = vld [vmem:[%s0 + $0x30] sm:$0xff]
    %v28 = vld [vmem:[%s0 + $0x38] sm:$0xff]
    %v29 = vld [vmem:[%s0 + $0x40] sm:$0xff]
    %v30 = vld [vmem:[%s0 + $0x48] sm:$0xff]
    %v31 = vld [vmem:[%s0 + $0x50] sm:$0xff]
    %v32 = vld [vmem:[%s0 + $0x58] sm:$0xff]
    %v33 = vld [vmem:[%s0 + $0x60] sm:$0xff]
    %v34 = vld [vmem:[%s0 + $0x68] sm:$0xff]
    %v35 = vld [vmem:[%s0 + $0x70] sm:$0xff]
    %v36 = vld [vmem:[%s0 + $0x78] sm:$0xff]
    %v37 = vld [vmem:[%s3] sm:$0xff]
    %v38 = vld [vmem:[%s3 + $0x8] sm:$0xff]
    %vm39 = vcmask 130048
    %v41 = vsel %vm39, %v21, 0
    %v44 = vsel %vm39, %v22, 0
    %v47 = vsel %vm39, %v23, 0
    %v50 = vsel %vm39, %v24, 0
    %v53 = vsel %vm39, %v25, 0
    %v56 = vsel %vm39, %v26, 0
    %v59 = vsel %vm39, %v27, 0
    %v62 = vsel %vm39, %v28, 0
    %v65 = vsel %vm39, %v29, 0
    %v68 = vsel %vm39, %v30, 0
    %v71 = vsel %vm39, %v31, 0
    %v74 = vsel %vm39, %v32, 0
    %v77 = vsel %vm39, %v33, 0
    %v80 = vsel %vm39, %v34, 0
    %v83 = vsel %vm39, %v35, 0
    %v86 = vsel %vm39, %v36, 0
    %88 = vmatprep.subr.mxu0 0.0
    %89 = vmatpush1.msra.mxu0 %v37
    %90 = vmatprep.subr.mxu0 0.0
    %91 = vmatpush1.msra.mxu0 %v38
    %92 = vmatprep.subr.mxu0 0.0
    %93 = vmatpush1.msra.mxu0 0.0
    %94 = vmatprep.subr.mxu0 0.0
    %95 = vmatpush1.msra.mxu0 0.0
    %96 = vmatprep.subr.mxu0 0.0
    %97 = vmatpush1.msra.mxu0 0.0
    %98 = vmatprep.subr.mxu0 0.0
    %99 = vmatpush1.msra.mxu0 0.0
    %100 = vmatprep.subr.mxu0 0.0
    %101 = vmatpush1.msra.mxu0 0.0
    %102 = vmatprep.subr.mxu0 0.0
    %103 = vmatpush1.msra.mxu0 0.0
    %104 = vmatprep.subr.mxu0 0.0
    %105 = vmatpush1.msra.mxu0 0.0
    %106 = vmatprep.subr.mxu0 0.0
    %107 = vmatpush1.msra.mxu0 0.0
    %108 = vmatprep.subr.mxu0 0.0
    %109 = vmatpush1.msra.mxu0 0.0
    %110 = vmatprep.subr.mxu0 0.0
    %111 = vmatpush1.msra.mxu0 0.0
    %112 = vmatprep.subr.mxu0 0.0
    %113 = vmatpush1.msra.mxu0 0.0
    %114 = vmatprep.subr.mxu0 0.0
    %115 = vmatpush1.msra.mxu0 0.0
    %116 = vmatprep.subr.mxu0 0.0
    %117 = vmatpush1.msra.mxu0 0.0
    %118 = vmatprep.subr.mxu0 0.0
    %119 = vmatpush1.msra.mxu0 0.0
    %120 = vmatprep.subr.mxu0 0.0
    %121 = vmatpush1.msra.mxu0 0.0
    %122 = vmatprep.subr.mxu0 0.0
    %123 = vmatpush1.msra.mxu0 0.0
    %124 = vmatprep.subr.mxu0 0.0
    %125 = vmatpush1.msra.mxu0 0.0
    %126 = vmatprep.subr.mxu0 0.0
    %127 = vmatpush1.msra.mxu0 0.0
    %128 = vmatprep.subr.mxu0 0.0
    %129 = vmatpush1.msra.mxu0 0.0
    %130 = vmatprep.subr.mxu0 0.0
    %131 = vmatpush1.msra.mxu0 0.0
    %132 = vmatprep.subr.mxu0 0.0
    %133 = vmatpush1.msra.mxu0 0.0
    %134 = vmatprep.subr.mxu0 0.0
    %135 = vmatpush1.msra.mxu0 0.0
    %136 = vmatprep.subr.mxu0 0.0
    %137 = vmatpush1.msra.mxu0 0.0
    %138 = vmatprep.subr.mxu0 0.0
    %139 = vmatpush1.msra.mxu0 0.0
    %140 = vmatprep.subr.mxu0 0.0
    %141 = vmatpush1.msra.mxu0 0.0
    %142 = vmatprep.subr.mxu0 0.0
    %143 = vmatpush1.msra.mxu0 0.0
    %144 = vmatprep.subr.mxu0 0.0
    %145 = vmatpush1.msra.mxu0 0.0
    %146 = vmatprep.subr.mxu0 0.0
    %147 = vmatpush1.msra.mxu0 0.0
    %148 = vmatprep.subr.mxu0 0.0
    %149 = vmatpush1.msra.mxu0 0.0
    %150 = vmatprep.subr.mxu0 0.0
    %151 = vmatpush1.msra.mxu0 0.0
    %152 = vmatprep.mubr.f32.mxu0 0.0
    %153 = vmatmul.mubr.f32.gmra.mrb[0].mxu0 %v41
    %v154 = vpop.f32.mrb[0].mxu0
    %v155 = vadd.f32 0.0, %v154
    %v156 = vpop.f32.mrb[0].mxu0
    %157 = vmatprep.mubr.f32.mxu0 0.0
    %158 = vmatmul.mubr.f32.gmra.mrb[0].mxu0 %v44
    %v159 = vpop.f32.mrb[0].mxu0
    %v160 = vadd.f32 0.0, %v159
    %v161 = vpop.f32.mrb[0].mxu0
    %162 = vmatprep.mubr.f32.mxu0 0.0
    %163 = vmatmul.mubr.f32.gmra.mrb[0].mxu0 %v47
    %v164 = vpop.f32.mrb[0].mxu0
    %v165 = vadd.f32 0.0, %v164
    %v166 = vpop.f32.mrb[0].mxu0
    %167 = vmatprep.mubr.f32.mxu0 0.0
    %168 = vmatmul.mubr.f32.gmra.mrb[0].mxu0 %v50
    %v169 = vpop.f32.mrb[0].mxu0
    %v170 = vadd.f32 0.0, %v169
    %v171 = vpop.f32.mrb[0].mxu0
    %172 = vmatprep.mubr.f32.mxu0 0.0
    %173 = vmatmul.mubr.f32.gmra.mrb[0].mxu0 %v53
    %v174 = vpop.f32.mrb[0].mxu0
    %v175 = vadd.f32 0.0, %v174
    %v176 = vpop.f32.mrb[0].mxu0
    %177 = vmatprep.mubr.f32.mxu0 0.0
    %178 = vmatmul.mubr.f32.gmra.mrb[0].mxu0 %v56
    %v179 = vpop.f32.mrb[0].mxu0
    %v180 = vadd.f32 0.0, %v179
    %v181 = vpop.f32.mrb[0].mxu0
    %182 = vmatprep.mubr.f32.mxu0 0.0
    %183 = vmatmul.mubr.f32.gmra.mrb[0].mxu0 %v59
    %v184 = vpop.f32.mrb[0].mxu0
    %v185 = vadd.f32 0.0, %v184
    %v186 = vpop.f32.mrb[0].mxu0
    %187 = vmatprep.mubr.f32.mxu0 0.0
    %188 = vmatmul.mubr.f32.gmra.mrb[0].mxu0 %v62
    %v189 = vpop.f32.mrb[0].mxu0
    %v190 = vadd.f32 0.0, %v189
    %v191 = vpop.f32.mrb[0].mxu0
    %192 = vmatprep.mubr.f32.mxu0 0.0
    %193 = vmatmul.mubr.f32.gmra.mrb[0].mxu0 %v65
    %v194 = vpop.f32.mrb[0].mxu0
    %v195 = vadd.f32 0.0, %v194
    %v196 = vpop.f32.mrb[0].mxu0
    %197 = vmatprep.mubr.f32.mxu0 0.0
    %198 = vmatmul.mubr.f32.gmra.mrb[0].mxu0 %v68
    %v199 = vpop.f32.mrb[0].mxu0
    %v200 = vadd.f32 0.0, %v199
    %v201 = vpop.f32.mrb[0].mxu0
    %202 = vmatprep.mubr.f32.mxu0 0.0
    %203 = vmatmul.mubr.f32.gmra.mrb[0].mxu0 %v71
    %v204 = vpop.f32.mrb[0].mxu0
    %v205 = vadd.f32 0.0, %v204
    %v206 = vpop.f32.mrb[0].mxu0
    %207 = vmatprep.mubr.f32.mxu0 0.0
    %208 = vmatmul.mubr.f32.gmra.mrb[0].mxu0 %v74
    %v209 = vpop.f32.mrb[0].mxu0
    %v210 = vadd.f32 0.0, %v209
    %v211 = vpop.f32.mrb[0].mxu0
    %212 = vmatprep.mubr.f32.mxu0 0.0
    %213 = vmatmul.mubr.f32.gmra.mrb[0].mxu0 %v77
    %v214 = vpop.f32.mrb[0].mxu0
    %v215 = vadd.f32 0.0, %v214
    %v216 = vpop.f32.mrb[0].mxu0
    %217 = vmatprep.mubr.f32.mxu0 0.0
    %218 = vmatmul.mubr.f32.gmra.mrb[0].mxu0 %v80
    %v219 = vpop.f32.mrb[0].mxu0
    %v220 = vadd.f32 0.0, %v219
    %v221 = vpop.f32.mrb[0].mxu0
    %222 = vmatprep.mubr.f32.mxu0 0.0
    %223 = vmatmul.mubr.f32.gmra.mrb[0].mxu0 %v83
    %v224 = vpop.f32.mrb[0].mxu0
    %v225 = vadd.f32 0.0, %v224
    %v226 = vpop.f32.mrb[0].mxu0
    %227 = vmatprep.mubr.f32.mxu0 0.0
    %228 = vmatmul.mubr.f32.gmra.mrb[0].mxu0 %v86
    %v229 = vpop.f32.mrb[0].mxu0
    %v230 = vadd.f32 0.0, %v229
    %v231 = vpop.f32.mrb[0].mxu0
    %232 = vdwg.mxu0
    %v233 = vld [vmem:[%s2] sm:$0xff]
    %v234 = vld [vmem:[%s2 + $0x8] sm:$0xff]
    %v235 = vld [vmem:[%s2 + $0x10] sm:$0xff]
    %v236 = vld [vmem:[%s2 + $0x18] sm:$0xff]
    %239 = vrot.lane.b32.xlu0 %v165, 32
    %v240 = vpop.permute.xlu0 %239
    %241 = vrot.lane.b32.xlu0 %v170, 32
    %v242 = vpop.permute.xlu0 %241
    %247 = vrot.lane.b32.xlu0 %v175, 64
    %v248 = vpop.permute.xlu0 %247
    %249 = vrot.lane.b32.xlu0 %v180, 64
    %v250 = vpop.permute.xlu0 %249
    %255 = vrot.lane.b32.xlu0 %v185, 96
    %v256 = vpop.permute.xlu0 %255
    %257 = vrot.lane.b32.xlu0 %v190, 96
    %v258 = vpop.permute.xlu0 %257
    %vm261 = vcmask 261120
    %v262 = vsel %vm261, %v155, %v240
    %v263 = vsel %vm261, %v160, %v242
    %vm264 = vcmask 523264
    %v265 = vsel %vm264, %v262, %v248
    %v266 = vsel %vm264, %v263, %v250
    %vm267 = vcmask 785408
    %v268 = vsel %vm267, %v265, %v256
    %v269 = vsel %vm267, %v266, %v258
    %v271 = vsel %vm39, %v233, 0
    %v274 = vsel %vm39, %v234, 0
    %v277 = vsel %vm39, %v235, 0
    %v280 = vsel %vm39, %v236, 0
    %282 = vmatprep.subr.mxu0 0.0
    %283 = vmatpush1.msra.mxu0 %v268
    %284 = vmatprep.subr.mxu0 0.0
    %285 = vmatpush1.msra.mxu0 %v269
    %286 = vmatprep.subr.mxu0 0.0
    %287 = vmatpush1.msra.mxu0 0.0
    %288 = vmatprep.subr.mxu0 0.0
    %289 = vmatpush1.msra.mxu0 0.0
    %290 = vmatprep.subr.mxu0 0.0
    %291 = vmatpush1.msra.mxu0 0.0
    %292 = vmatprep.subr.mxu0 0.0
    %293 = vmatpush1.msra.mxu0 0.0
    %294 = vmatprep.subr.mxu0 0.0
    %295 = vmatpush1.msra.mxu0 0.0
    %296 = vmatprep.subr.mxu0 0.0
    %297 = vmatpush1.msra.mxu0 0.0
    %298 = vmatprep.subr.mxu0 0.0
    %299 = vmatpush1.msra.mxu0 0.0
    %300 = vmatprep.subr.mxu0 0.0
    %301 = vmatpush1.msra.mxu0 0.0
    %302 = vmatprep.subr.mxu0 0.0
    %303 = vmatpush1.msra.mxu0 0.0
    %304 = vmatprep.subr.mxu0 0.0
    %305 = vmatpush1.msra.mxu0 0.0
    %306 = vmatprep.subr.mxu0 0.0
    %307 = vmatpush1.msra.mxu0 0.0
    %308 = vmatprep.subr.mxu0 0.0
    %309 = vmatpush1.msra.mxu0 0.0
    %310 = vmatprep.subr.mxu0 0.0
    %311 = vmatpush1.msra.mxu0 0.0
    %312 = vmatprep.subr.mxu0 0.0
    %313 = vmatpush1.msra.mxu0 0.0
    %314 = vmatprep.subr.mxu0 0.0
    %315 = vmatpush1.msra.mxu0 0.0
    %316 = vmatprep.subr.mxu0 0.0
    %317 = vmatpush1.msra.mxu0 0.0
    %318 = vmatprep.subr.mxu0 0.0
    %319 = vmatpush1.msra.mxu0 0.0
    %320 = vmatprep.subr.mxu0 0.0
    %321 = vmatpush1.msra.mxu0 0.0
    %322 = vmatprep.subr.mxu0 0.0
    %323 = vmatpush1.msra.mxu0 0.0
    %324 = vmatprep.subr.mxu0 0.0
    %325 = vmatpush1.msra.mxu0 0.0
    %326 = vmatprep.subr.mxu0 0.0
    %327 = vmatpush1.msra.mxu0 0.0
    %328 = vmatprep.subr.mxu0 0.0
    %329 = vmatpush1.msra.mxu0 0.0
    %330 = vmatprep.subr.mxu0 0.0
    %331 = vmatpush1.msra.mxu0 0.0
    %332 = vmatprep.subr.mxu0 0.0
    %333 = vmatpush1.msra.mxu0 0.0
    %334 = vmatprep.subr.mxu0 0.0
    %335 = vmatpush1.msra.mxu0 0.0
    %336 = vmatprep.subr.mxu0 0.0
    %337 = vmatpush1.msra.mxu0 0.0
    %338 = vmatprep.subr.mxu0 0.0
    %339 = vmatpush1.msra.mxu0 0.0
    %340 = vmatprep.subr.mxu0 0.0
    %341 = vmatpush1.msra.mxu0 0.0
    %342 = vmatprep.subr.mxu0 0.0
    %343 = vmatpush1.msra.mxu0 0.0
    %344 = vmatprep.subr.mxu0 0.0
    %345 = vmatpush1.msra.mxu0 0.0
    %346 = vmatprep.mubr.f32.mxu0 0.0
    %347 = vmatmul.mubr.f32.gmra.mrb[0].mxu0 %v271
    %v348 = vpop.f32.mrb[0].mxu0
    %v349 = vadd.f32 0.0, %v348
    %v350 = vpop.f32.mrb[0].mxu0
    %351 = vmatprep.mubr.f32.mxu0 0.0
    %352 = vmatmul.mubr.f32.gmra.mrb[0].mxu0 %v274
    %v353 = vpop.f32.mrb[0].mxu0
    %v354 = vadd.f32 0.0, %v353
    %v355 = vpop.f32.mrb[0].mxu0
    %356 = vmatprep.mubr.f32.mxu0 0.0
    %357 = vmatmul.mubr.f32.gmra.mrb[0].mxu0 %v277
    %v358 = vpop.f32.mrb[0].mxu0
    %v359 = vadd.f32 0.0, %v358
    %v360 = vpop.f32.mrb[0].mxu0
    %361 = vmatprep.mubr.f32.mxu0 0.0
    %362 = vmatmul.mubr.f32.gmra.mrb[0].mxu0 %v280
    %v363 = vpop.f32.mrb[0].mxu0
    %v364 = vadd.f32 0.0, %v363
    %v365 = vpop.f32.mrb[0].mxu0
    %366 = vdwg.mxu0
    %369 = vrot.lane.b32.xlu0 %v205, 32
    %v370 = vpop.permute.xlu0 %369
    %371 = vrot.lane.b32.xlu0 %v210, 32
    %v372 = vpop.permute.xlu0 %371
    %377 = vrot.lane.b32.xlu0 %v215, 64
    %v378 = vpop.permute.xlu0 %377
    %379 = vrot.lane.b32.xlu0 %v220, 64
    %v380 = vpop.permute.xlu0 %379
    %385 = vrot.lane.b32.xlu0 %v225, 96
    %v386 = vpop.permute.xlu0 %385
    %387 = vrot.lane.b32.xlu0 %v230, 96
    %v388 = vpop.permute.xlu0 %387
    %v391 = vsel %vm261, %v195, %v370
    %v392 = vsel %vm261, %v200, %v372
    %v393 = vsel %vm264, %v391, %v378
    %v394 = vsel %vm264, %v392, %v380
    %v395 = vsel %vm267, %v393, %v386
    %v396 = vsel %vm267, %v394, %v388
    %397 = vmatprep.subr.mxu0 0.0
    %398 = vmatpush1.msra.mxu0 %v395
    %399 = vmatprep.subr.mxu0 0.0
    %400 = vmatpush1.msra.mxu0 %v396
    %401 = vmatprep.subr.mxu0 0.0
    %402 = vmatpush1.msra.mxu0 0.0
    %403 = vmatprep.subr.mxu0 0.0
    %404 = vmatpush1.msra.mxu0 0.0
    %405 = vmatprep.subr.mxu0 0.0
    %406 = vmatpush1.msra.mxu0 0.0
    %407 = vmatprep.subr.mxu0 0.0
    %408 = vmatpush1.msra.mxu0 0.0
    %409 = vmatprep.subr.mxu0 0.0
    %410 = vmatpush1.msra.mxu0 0.0
    %411 = vmatprep.subr.mxu0 0.0
    %412 = vmatpush1.msra.mxu0 0.0
    %413 = vmatprep.subr.mxu0 0.0
    %414 = vmatpush1.msra.mxu0 0.0
    %415 = vmatprep.subr.mxu0 0.0
    %416 = vmatpush1.msra.mxu0 0.0
    %417 = vmatprep.subr.mxu0 0.0
    %418 = vmatpush1.msra.mxu0 0.0
    %419 = vmatprep.subr.mxu0 0.0
    %420 = vmatpush1.msra.mxu0 0.0
    %421 = vmatprep.subr.mxu0 0.0
    %422 = vmatpush1.msra.mxu0 0.0
    %423 = vmatprep.subr.mxu0 0.0
    %424 = vmatpush1.msra.mxu0 0.0
    %425 = vmatprep.subr.mxu0 0.0
    %426 = vmatpush1.msra.mxu0 0.0
    %427 = vmatprep.subr.mxu0 0.0
    %428 = vmatpush1.msra.mxu0 0.0
    %429 = vmatprep.subr.mxu0 0.0
    %430 = vmatpush1.msra.mxu0 0.0
    %431 = vmatprep.subr.mxu0 0.0
    %432 = vmatpush1.msra.mxu0 0.0
    %433 = vmatprep.subr.mxu0 0.0
    %434 = vmatpush1.msra.mxu0 0.0
    %435 = vmatprep.subr.mxu0 0.0
    %436 = vmatpush1.msra.mxu0 0.0
    %437 = vmatprep.subr.mxu0 0.0
    %438 = vmatpush1.msra.mxu0 0.0
    %439 = vmatprep.subr.mxu0 0.0
    %440 = vmatpush1.msra.mxu0 0.0
    %441 = vmatprep.subr.mxu0 0.0
    %442 = vmatpush1.msra.mxu0 0.0
    %443 = vmatprep.subr.mxu0 0.0
    %444 = vmatpush1.msra.mxu0 0.0
    %445 = vmatprep.subr.mxu0 0.0
    %446 = vmatpush1.msra.mxu0 0.0
    %447 = vmatprep.subr.mxu0 0.0
    %448 = vmatpush1.msra.mxu0 0.0
    %449 = vmatprep.subr.mxu0 0.0
    %450 = vmatpush1.msra.mxu0 0.0
    %451 = vmatprep.subr.mxu0 0.0
    %452 = vmatpush1.msra.mxu0 0.0
    %453 = vmatprep.subr.mxu0 0.0
    %454 = vmatpush1.msra.mxu0 0.0
    %455 = vmatprep.subr.mxu0 0.0
    %456 = vmatpush1.msra.mxu0 0.0
    %457 = vmatprep.subr.mxu0 0.0
    %458 = vmatpush1.msra.mxu0 0.0
    %459 = vmatprep.subr.mxu0 0.0
    %460 = vmatpush1.msra.mxu0 0.0
    %461 = vmatprep.mubr.f32.mxu0 0.0
    %462 = vmatmul.mubr.f32.gmra.mrb[0].mxu0 %v271
    %v463 = vpop.f32.mrb[0].mxu0
    %v464 = vadd.f32 0.0, %v463
    %v465 = vpop.f32.mrb[0].mxu0
    %466 = vmatprep.mubr.f32.mxu0 0.0
    %467 = vmatmul.mubr.f32.gmra.mrb[0].mxu0 %v274
    %v468 = vpop.f32.mrb[0].mxu0
    %v469 = vadd.f32 0.0, %v468
    %v470 = vpop.f32.mrb[0].mxu0
    %471 = vmatprep.mubr.f32.mxu0 0.0
    %472 = vmatmul.mubr.f32.gmra.mrb[0].mxu0 %v277
    %v473 = vpop.f32.mrb[0].mxu0
    %v474 = vadd.f32 0.0, %v473
    %v475 = vpop.f32.mrb[0].mxu0
    %476 = vmatprep.mubr.f32.mxu0 0.0
    %477 = vmatmul.mubr.f32.gmra.mrb[0].mxu0 %v280
    %v478 = vpop.f32.mrb[0].mxu0
    %v479 = vadd.f32 0.0, %v478
    %v480 = vpop.f32.mrb[0].mxu0
    %481 = vdwg.mxu0
    %482 = vrot.lane.b32.xlu0 %v349, 32
    %v483 = vpop.permute.xlu0 %482
    %484 = vrot.lane.b32.xlu0 %v354, 32
    %v485 = vpop.permute.xlu0 %484
    %486 = vrot.lane.b32.xlu0 %v359, 32
    %v487 = vpop.permute.xlu0 %486
    %488 = vrot.lane.b32.xlu0 %v364, 32
    %v489 = vpop.permute.xlu0 %488
    %490 = vrot.lane.b32.xlu0 %v464, 32
    %v491 = vpop.permute.xlu0 %490
    %492 = vrot.lane.b32.xlu0 %v469, 32
    %v493 = vpop.permute.xlu0 %492
    %494 = vrot.lane.b32.xlu0 %v474, 32
    %v495 = vpop.permute.xlu0 %494
    %496 = vrot.lane.b32.xlu0 %v479, 32
    %v497 = vpop.permute.xlu0 %496
    %v498 = vmax.f32 %v349, %v483
    %v499 = vmax.f32 %v354, %v485
    %v500 = vmax.f32 %v359, %v487
    %v501 = vmax.f32 %v364, %v489
    %v502 = vmax.f32 %v464, %v491
    %v503 = vmax.f32 %v469, %v493
    %v504 = vmax.f32 %v474, %v495
    %v505 = vmax.f32 %v479, %v497
    %506 = vrot.lane.b32.xlu0 %v498, 64
    %v507 = vpop.permute.xlu0 %506
    %508 = vrot.lane.b32.xlu0 %v499, 64
    %v509 = vpop.permute.xlu0 %508
    %510 = vrot.lane.b32.xlu0 %v500, 64
    %v511 = vpop.permute.xlu0 %510
    %512 = vrot.lane.b32.xlu0 %v501, 64
    %v513 = vpop.permute.xlu0 %512
    %514 = vrot.lane.b32.xlu0 %v502, 64
    %v515 = vpop.permute.xlu0 %514
    %516 = vrot.lane.b32.xlu0 %v503, 64
    %v517 = vpop.permute.xlu0 %516
    %518 = vrot.lane.b32.xlu0 %v504, 64
    %v519 = vpop.permute.xlu0 %518
    %520 = vrot.lane.b32.xlu0 %v505, 64
    %v521 = vpop.permute.xlu0 %520
    %v522 = vmax.f32 %v498, %v507
    %v523 = vmax.f32 %v499, %v509
    %v524 = vmax.f32 %v500, %v511
    %v525 = vmax.f32 %v501, %v513
    %v526 = vmax.f32 %v502, %v515
    %v527 = vmax.f32 %v503, %v517
    %v528 = vmax.f32 %v504, %v519
    %v529 = vmax.f32 %v505, %v521
    %v530 = vsub.f32 %v349, %v522
    %v531 = vsub.f32 %v354, %v523
    %v532 = vsub.f32 %v359, %v524
    %v533 = vsub.f32 %v364, %v525
    %v534 = vsub.f32 %v464, %v526
    %v535 = vsub.f32 %v469, %v527
    %v536 = vsub.f32 %v474, %v528
    %v537 = vsub.f32 %v479, %v529
    %v538 = vmul.f32 %v530, 1.442695
    %v539 = vpow.pop %v538
    %v540 = vmul.f32 %v531, 1.442695
    %v541 = vpow.pop %v540
    %v542 = vmul.f32 %v532, 1.442695
    %v543 = vpow.pop %v542
    %v544 = vmul.f32 %v533, 1.442695
    %v545 = vpow.pop %v544
    %v546 = vmul.f32 %v534, 1.442695
    %v547 = vpow.pop %v546
    %v548 = vmul.f32 %v535, 1.442695
    %v549 = vpow.pop %v548
    %v550 = vmul.f32 %v536, 1.442695
    %v551 = vpow.pop %v550
    %v552 = vmul.f32 %v537, 1.442695
    %v553 = vpow.pop %v552
    %554 = vrot.lane.b32.xlu0 %v539, 32
    %v555 = vpop.permute.xlu0 %554
    %556 = vrot.lane.b32.xlu0 %v541, 32
    %v557 = vpop.permute.xlu0 %556
    %558 = vrot.lane.b32.xlu0 %v543, 32
    %v559 = vpop.permute.xlu0 %558
    %560 = vrot.lane.b32.xlu0 %v545, 32
    %v561 = vpop.permute.xlu0 %560
    %562 = vrot.lane.b32.xlu0 %v547, 32
    %v563 = vpop.permute.xlu0 %562
    %564 = vrot.lane.b32.xlu0 %v549, 32
    %v565 = vpop.permute.xlu0 %564
    %566 = vrot.lane.b32.xlu0 %v551, 32
    %v567 = vpop.permute.xlu0 %566
    %568 = vrot.lane.b32.xlu0 %v553, 32
    %v569 = vpop.permute.xlu0 %568
    %v570 = vadd.f32 %v539, %v555
    %v571 = vadd.f32 %v541, %v557
    %v572 = vadd.f32 %v543, %v559
    %v573 = vadd.f32 %v545, %v561
    %v574 = vadd.f32 %v547, %v563
    %v575 = vadd.f32 %v549, %v565
    %v576 = vadd.f32 %v551, %v567
    %v577 = vadd.f32 %v553, %v569
    %578 = vrot.lane.b32.xlu0 %v570, 64
    %v579 = vpop.permute.xlu0 %578
    %580 = vrot.lane.b32.xlu0 %v571, 64
    %v581 = vpop.permute.xlu0 %580
    %582 = vrot.lane.b32.xlu0 %v572, 64
    %v583 = vpop.permute.xlu0 %582
    %584 = vrot.lane.b32.xlu0 %v573, 64
    %v585 = vpop.permute.xlu0 %584
    %586 = vrot.lane.b32.xlu0 %v574, 64
    %v587 = vpop.permute.xlu0 %586
    %588 = vrot.lane.b32.xlu0 %v575, 64
    %v589 = vpop.permute.xlu0 %588
    %590 = vrot.lane.b32.xlu0 %v576, 64
    %v591 = vpop.permute.xlu0 %590
    %592 = vrot.lane.b32.xlu0 %v577, 64
    %v593 = vpop.permute.xlu0 %592
    %v594 = vadd.f32 %v570, %v579
    %v595 = vadd.f32 %v571, %v581
    %v596 = vadd.f32 %v572, %v583
    %v597 = vadd.f32 %v573, %v585
    %v598 = vadd.f32 %v574, %v587
    %v599 = vadd.f32 %v575, %v589
    %v600 = vadd.f32 %v576, %v591
    %v601 = vadd.f32 %v577, %v593
    %v602 = vrcp.pop %v594
    %v603 = vrcp.pop %v595
    %v604 = vrcp.pop %v596
    %v605 = vrcp.pop %v597
    %v606 = vrcp.pop %v598
    %v607 = vrcp.pop %v599
    %v608 = vrcp.pop %v600
    %v609 = vrcp.pop %v601
    %v610 = vmul.f32 %v594, %v602
    %v611 = vmul.f32 %v595, %v603
    %v612 = vmul.f32 %v596, %v604
    %v613 = vmul.f32 %v597, %v605
    %v614 = vmul.f32 %v598, %v606
    %v615 = vmul.f32 %v599, %v607
    %v616 = vmul.f32 %v600, %v608
    %v617 = vmul.f32 %v601, %v609
    %v618 = vsub.f32 2.0, %v610
    %v619 = vsub.f32 2.0, %v611
    %v620 = vsub.f32 2.0, %v612
    %v621 = vsub.f32 2.0, %v613
    %v622 = vsub.f32 2.0, %v614
    %v623 = vsub.f32 2.0, %v615
    %v624 = vsub.f32 2.0, %v616
    %v625 = vsub.f32 2.0, %v617
    %v626 = vmul.f32 %v602, %v618
    %v627 = vmul.f32 %v603, %v619
    %v628 = vmul.f32 %v604, %v620
    %v629 = vmul.f32 %v605, %v621
    %v630 = vmul.f32 %v606, %v622
    %v631 = vmul.f32 %v607, %v623
    %v632 = vmul.f32 %v608, %v624
    %v633 = vmul.f32 %v609, %v625
    %v634 = vmul.f32 %v539, %v626
    %v635 = vmul.f32 %v541, %v627
    %v636 = vmul.f32 %v543, %v628
    %v637 = vmul.f32 %v545, %v629
    %v638 = vmul.f32 %v547, %v630
    %v639 = vmul.f32 %v549, %v631
    %v640 = vmul.f32 %v551, %v632
    %v641 = vmul.f32 %v553, %v633
    %v642 = vld [vmem:[%s1] sm:$0xff]
    %v643 = vld [vmem:[%s1 + $0x8] sm:$0xff]
    %v644 = vld [vmem:[%s1 + $0x10] sm:$0xff]
    %v645 = vld [vmem:[%s1 + $0x18] sm:$0xff]
    %v646 = vld [vmem:[%s1 + $0x20] sm:$0xff]
    %v647 = vld [vmem:[%s1 + $0x28] sm:$0xff]
    %v648 = vld [vmem:[%s1 + $0x30] sm:$0xff]
    %v649 = vld [vmem:[%s1 + $0x38] sm:$0xff]
    %650 = vrot.lane.b32.xlu0 %v642, 32
    %v651 = vpop.permute.xlu0 %650
    %652 = vrot.lane.b32.xlu0 %v643, 32
    %v653 = vpop.permute.xlu0 %652
    %654 = vrot.lane.b32.xlu0 %v644, 32
    %v655 = vpop.permute.xlu0 %654
    %656 = vrot.lane.b32.xlu0 %v645, 32
    %v657 = vpop.permute.xlu0 %656
    %658 = vrot.lane.b32.xlu0 %v646, 32
    %v659 = vpop.permute.xlu0 %658
    %660 = vrot.lane.b32.xlu0 %v647, 32
    %v661 = vpop.permute.xlu0 %660
    %662 = vrot.lane.b32.xlu0 %v648, 32
    %v663 = vpop.permute.xlu0 %662
    %664 = vrot.lane.b32.xlu0 %v649, 32
    %v665 = vpop.permute.xlu0 %664
    %666 = vrot.lane.b32.xlu0 %v642, 64
    %v667 = vpop.permute.xlu0 %666
    %668 = vrot.lane.b32.xlu0 %v643, 64
    %v669 = vpop.permute.xlu0 %668
    %670 = vrot.lane.b32.xlu0 %v644, 64
    %v671 = vpop.permute.xlu0 %670
    %672 = vrot.lane.b32.xlu0 %v645, 64
    %v673 = vpop.permute.xlu0 %672
    %674 = vrot.lane.b32.xlu0 %v646, 64
    %v675 = vpop.permute.xlu0 %674
    %676 = vrot.lane.b32.xlu0 %v647, 64
    %v677 = vpop.permute.xlu0 %676
    %678 = vrot.lane.b32.xlu0 %v648, 64
    %v679 = vpop.permute.xlu0 %678
    %680 = vrot.lane.b32.xlu0 %v649, 64
    %v681 = vpop.permute.xlu0 %680
    %682 = vrot.lane.b32.xlu0 %v642, 96
    %v683 = vpop.permute.xlu0 %682
    %684 = vrot.lane.b32.xlu0 %v643, 96
    %v685 = vpop.permute.xlu0 %684
    %686 = vrot.lane.b32.xlu0 %v644, 96
    %v687 = vpop.permute.xlu0 %686
    %688 = vrot.lane.b32.xlu0 %v645, 96
    %v689 = vpop.permute.xlu0 %688
    %690 = vrot.lane.b32.xlu0 %v646, 96
    %v691 = vpop.permute.xlu0 %690
    %692 = vrot.lane.b32.xlu0 %v647, 96
    %v693 = vpop.permute.xlu0 %692
    %694 = vrot.lane.b32.xlu0 %v648, 96
    %v695 = vpop.permute.xlu0 %694
    %696 = vrot.lane.b32.xlu0 %v649, 96
    %v697 = vpop.permute.xlu0 %696
    %v698 = vsel %vm261, %v642, %v651
    %v699 = vsel %vm261, %v643, %v653
    %v700 = vsel %vm261, %v644, %v655
    %v701 = vsel %vm261, %v645, %v657
    %v702 = vsel %vm261, %v646, %v659
    %v703 = vsel %vm261, %v647, %v661
    %v704 = vsel %vm261, %v648, %v663
    %v705 = vsel %vm261, %v649, %v665
    %v706 = vsel %vm264, %v698, %v667
    %v707 = vsel %vm264, %v699, %v669
    %v708 = vsel %vm264, %v700, %v671
    %v709 = vsel %vm264, %v701, %v673
    %v710 = vsel %vm264, %v702, %v675
    %v711 = vsel %vm264, %v703, %v677
    %v712 = vsel %vm264, %v704, %v679
    %v713 = vsel %vm264, %v705, %v681
    %v714 = vsel %vm267, %v706, %v683
    %v715 = vsel %vm267, %v707, %v685
    %v716 = vsel %vm267, %v708, %v687
    %v717 = vsel %vm267, %v709, %v689
    %v718 = vsel %vm267, %v710, %v691
    %v719 = vsel %vm267, %v711, %v693
    %v720 = vsel %vm267, %v712, %v695
    %v721 = vsel %vm267, %v713, %v697
    %v722 = vld [vmem:[%s4] sm:$0x1]
    %v723 = vlaneseq
    %v724 = vshrl.u32 %v723, 7
    %v725 = vsub.s32 0, %v724
    %v726 = vrot.slane %v722, %v725
    %vm727 = vcmp.eq.s32.totalorder %v714, %v726
    %vm728 = vcmp.eq.s32.totalorder %v715, %v726
    %vm729 = vcmp.eq.s32.totalorder %v716, %v726
    %vm730 = vcmp.eq.s32.totalorder %v717, %v726
    %vm731 = vcmp.eq.s32.totalorder %v718, %v726
    %vm732 = vcmp.eq.s32.totalorder %v719, %v726
    %vm733 = vcmp.eq.s32.totalorder %v720, %v726
    %vm734 = vcmp.eq.s32.totalorder %v721, %v726
    %v735 = vsel %vm727, 1, 0
    %v736 = vsel %vm728, 1, 0
    %v737 = vsel %vm729, 1, 0
    %v738 = vsel %vm730, 1, 0
    %v739 = vsel %vm731, 1, 0
    %v740 = vsel %vm732, 1, 0
    %v741 = vsel %vm733, 1, 0
    %v742 = vsel %vm734, 1, 0
    %v743 = vcvt.s32.f32 %v735
    %v744 = vcvt.s32.f32 %v736
    %v745 = vcvt.s32.f32 %v737
    %v746 = vcvt.s32.f32 %v738
    %v747 = vcvt.s32.f32 %v739
    %v748 = vcvt.s32.f32 %v740
    %v749 = vcvt.s32.f32 %v741
    %v750 = vcvt.s32.f32 %v742
    %v751 = vmul.f32 %v634, %v743
    %v752 = vmul.f32 %v635, %v744
    %v753 = vmul.f32 %v636, %v745
    %v754 = vmul.f32 %v637, %v746
    %v755 = vmul.f32 %v638, %v747
    %v756 = vmul.f32 %v639, %v748
    %v757 = vmul.f32 %v640, %v749
    %v758 = vmul.f32 %v641, %v750
    %v759 = vadd.f32 %v751, %v752
    %v760 = vadd.f32 %v759, %v753
    %v761 = vadd.f32 %v760, %v754
    %v762 = vrot.slane %v761, 4
    %v763 = vadd.f32 %v761, %v762
    %v764 = vrot.slane %v763, 2
    %v765 = vadd.f32 %v763, %v764
    %v766 = vrot.slane %v765, 1
    %v767 = vadd.f32 %v765, %v766
    %v768 = vadd.f32 %v755, %v756
    %v769 = vadd.f32 %v768, %v757
    %v770 = vadd.f32 %v769, %v758
    %v771 = vrot.slane %v770, 4
    %v772 = vadd.f32 %v770, %v771
    %v773 = vrot.slane %v772, 2
    %v774 = vadd.f32 %v772, %v773
    %v775 = vrot.slane %v774, 1
    %v776 = vadd.f32 %v774, %v775
    %v777 = vadd.f32 %v634, %v635
    %v778 = vadd.f32 %v777, %v636
    %v779 = vadd.f32 %v778, %v637
    %v780 = vrot.slane %v779, 4
    %v781 = vadd.f32 %v779, %v780
    %v782 = vrot.slane %v781, 2
    %v783 = vadd.f32 %v781, %v782
    %v784 = vrot.slane %v783, 1
    %v785 = vadd.f32 %v783, %v784
    %v786 = vadd.f32 %v638, %v639
    %v787 = vadd.f32 %v786, %v640
    %v788 = vadd.f32 %v787, %v641
    %v789 = vrot.slane %v788, 4
    %v790 = vadd.f32 %v788, %v789
    %v791 = vrot.slane %v790, 2
    %v792 = vadd.f32 %v790, %v791
    %v793 = vrot.slane %v792, 1
    %v794 = vadd.f32 %v792, %v793
    %v795 = vadd.f32 %v743, %v744
    %v796 = vadd.f32 %v795, %v745
    %v797 = vadd.f32 %v796, %v746
    %v798 = vrot.slane %v797, 4
    %v799 = vadd.f32 %v797, %v798
    %v800 = vrot.slane %v799, 2
    %v801 = vadd.f32 %v799, %v800
    %v802 = vrot.slane %v801, 1
    %v803 = vadd.f32 %v801, %v802
    %v804 = vadd.f32 %v747, %v748
    %v805 = vadd.f32 %v804, %v749
    %v806 = vadd.f32 %v805, %v750
    %v807 = vrot.slane %v806, 4
    %v808 = vadd.f32 %v806, %v807
    %v809 = vrot.slane %v808, 2
    %v810 = vadd.f32 %v808, %v809
    %v811 = vrot.slane %v810, 1
    %v812 = vadd.f32 %v810, %v811
    %v813 = vadd.f32 %v785, %v803
    %v814 = vadd.f32 %v794, %v812
    %v815 = vsub.f32 %v813, %v767
    %v816 = vsub.f32 %v814, %v776
    %817 = vst [vmem:[#allocation2] sm:$0x1] %v767
    %818 = vst [vmem:[#allocation2 + $0x2] sm:$0x1] %v776
    %819 = vst [vmem:[#allocation2 + $0x1] sm:$0x1] %v815
    %820 = vst [vmem:[#allocation2 + $0x3] sm:$0x1] %v816
    // Predicated region
    $region22: #{tpu_custom_call.1} parent=1 // pred_check
      _
    $region23: #{tpu_custom_call.1} parent=1 // pred_check_branch
      %822 = sbr.rel (0) target = $region25
    $region24: #{tpu_custom_call.1} parent=1 // pred_region
      %s824 = ssub.s32 64, 64
      %825 = vsyncadd [#allocation3], %s824
      %s826 = sshll.u32 [#allocation2], 4
      %s827 = int_to_ptr.vmem [resolvable:$true] %s826
      %832 = dma.vmem_to_hbm [thread:$0]  %s827, 64, %s5, [#allocation3], 32, 32, 2
    $region25: #{tpu_custom_call.1} parent=1 // pred_fallthru
      _
    // Predicated region
    $region26: #{tpu_custom_call.1} parent=1 // pred_check
      _
    $region27: #{tpu_custom_call.1} parent=1 // pred_check_branch
      %834 = sbr.rel (0) target = $region29
    $region28: #{tpu_custom_call.1} parent=1 // pred_region
      %835 = dma.done [#allocation3], 64
    $region29: #{tpu_custom_call.1} parent=1 // pred_fallthru
      _
    %836 = vsyncpa [#allocation3], 1

</llo_original>
